<compile_context>
chip_gen: v7x
topology: tpu7x:2x2x1
jax: 0.10.0
libtpu: 0.0.40
codegen_flags: <defaults>
</compile_context>

<pallas_src>
import functools

import jax
import jax.numpy as jnp
import numpy as np
from jax.experimental import pallas as pl
from jax.experimental.pallas import tpu as pltpu


def _round_up(x, m):
    return (x + m - 1) // m * m


# ------------------------------ Pallas kernel --------------------------------
def textcnn_kernel(ids_ref, table_ref, wf_ref, bcat_ref, dw_ref, db_ref,
                   out_ref, *, kmax):
    """One batch tile: fused gather -> conv/mean-pool -> ReLU -> decoder."""
    b_tile, L = ids_ref.shape
    vocab_pad, D = table_ref.shape

    ids = ids_ref[...]                                      # (bt, L) int32
    table = table_ref[...]                                  # (vocab_pad, D) bf16
    lane_ids = jax.lax.broadcasted_iota(jnp.int32, (b_tile, vocab_pad), 1)

    # Fused embedding gather: one-hot x table on the MXU, f32 accumulation.
    rows = []
    for p in range(L):                                      # static unroll over seq
        onehot = (ids[:, p:p + 1] == lane_ids).astype(table.dtype)
        rows.append(jnp.dot(onehot, table,
                            preferred_element_type=jnp.float32))   # (bt, D) f32

    # Shared full-sequence sum (f32).  Each windowed tap sum is
    #   s_{k,t} = s_full - (leading edge rows) - (trailing edge rows),
    # so only kmax-1 leading + kmax-1 trailing rows are needed besides s_full.
    s_full = rows[0]
    for p in range(1, L):
        s_full = s_full + rows[p]

    pieces = [s_full] + rows[:kmax - 1] + rows[L - (kmax - 1):]
    x = jnp.concatenate(pieces, axis=-1).astype(wf_ref.dtype)  # (bt, (2k-1)*D) bf16

    # Single fused MXU matmul covering every conv branch and every tap
    # (weights pre-scaled by 1/L_out and pre-combined in the wrapper).
    pooled = jnp.dot(x, wf_ref[...],
                     preferred_element_type=jnp.float32) + bcat_ref[...]
    enc = jnp.maximum(pooled, 0.0)                           # ReLU after mean-pool

    # TODO(synk): nn.Dropout(0.5) is identity here (inference / eval semantics).
    out = jnp.dot(enc, dw_ref[...],
                  preferred_element_type=jnp.float32) + db_ref[...]
    out_ref[...] = out.astype(out_ref.dtype)


# ---------------------- wrapper-side weight preprocessing ---------------------
def _build_fused_conv_weights(conv_w, conv_b, L, kmax):
    """Build W such that [s_full | r_0..r_{kmax-2} | r_{L-kmax+1}..r_{L-1}] @ W
    equals concat_j meanpool(conv_j(emb)) (pre-bias).  Exact: pooling is linear."""
    cols = []
    for w_cdk in conv_w:                                     # (c, D, k) PyTorch layout
        c, D, k = int(w_cdk.shape[0]), int(w_cdk.shape[1]), int(w_cdk.shape[2])
        l_out = L - k + 1
        taps = jnp.transpose(w_cdk, (2, 1, 0)).astype(jnp.float32) / l_out  # (k, D, c)
        zeros = jnp.zeros((D, c), jnp.float32)
        blocks = [jnp.sum(taps, axis=0)]                     # s_full term
        for p in range(kmax - 1):                            # front rows r_0..r_{kmax-2}
            blocks.append(-jnp.sum(taps[p + 1:k], axis=0) if p + 1 <= k - 1 else zeros)
        for d in range(kmax - 1, 0, -1):                     # back rows r_{L-d}
            blocks.append(-jnp.sum(taps[:k - d], axis=0) if k - 1 - d >= 0 else zeros)
        cols.append(jnp.concatenate(blocks, axis=0))         # ((2*kmax-1)*D, c)
    w_fused = jnp.concatenate(cols, axis=1)                  # ((2*kmax-1)*D, C_total)
    b_cat = jnp.concatenate(conv_b).astype(jnp.float32)[None, :]
    return w_fused, b_cat


# ---------------------------------- wrapper -----------------------------------
def textcnn_forward(inputs, params, *, b_tile=512, compute_dtype=jnp.bfloat16):
    """inputs: (B, L) int32 token ids -> (B, 2) logits."""
    B, L = inputs.shape
    kmax = max(int(w.shape[2]) for w in params["conv_w"])
    assert L >= kmax, "sequence must be at least the largest conv kernel"

    # Packed (vocab, 2E) channels-last embedding table, bf16 for DMA/MXU.
    table = jnp.concatenate(
        [params["embedding"], params["constant_embedding"]], axis=-1)
    vocab, D = table.shape
    vocab_pad = _round_up(int(vocab), 8)
    table = jnp.pad(table, ((0, vocab_pad - vocab), (0, 0))).astype(compute_dtype)

    # All conv branches / taps fused into one MXU-shaped weight.
    w_fused, b_cat = _build_fused_conv_weights(
        params["conv_w"], params["conv_b"], L, kmax)
    w_fused = w_fused.astype(compute_dtype)
    n_rows, c_total = int(w_fused.shape[0]), int(w_fused.shape[1])
    dec_w = params["dec_w"].T.astype(jnp.float32)            # (C_total, 2)
    dec_b = params["dec_b"].astype(jnp.float32)[None, :]     # (1, 2)

    # Batch tiling: pad to a multiple of the tile, 1-D "parallel" grid over batch.
    bt = min(b_tile, _round_up(B, 8))
    B_pad = _round_up(B, bt)
    ids = jnp.pad(inputs.astype(jnp.int32), ((0, B_pad - B), (0, 0)))
    grid = (B_pad // bt,)

    itemsize = jnp.dtype(compute_dtype).itemsize
    flops = 2 * B_pad * (L * vocab_pad * D + n_rows * c_total + c_total * 2)
    bytes_accessed = (B_pad * L * 4 + B_pad * 2 * 4
                      + (vocab_pad * D + n_rows * c_total) * itemsize
                      + (c_total + c_total * 2 + 2) * 4)

    out = pl.pallas_call(
        functools.partial(textcnn_kernel, kmax=kmax),
        out_shape=jax.ShapeDtypeStruct((B_pad, 2), jnp.float32),
        grid=grid,
        in_specs=[
            pl.BlockSpec((bt, L), lambda i: (i, 0)),             # token ids (per tile)
            pl.BlockSpec((vocab_pad, D), lambda i: (0, 0)),      # embedding table (resident)
            pl.BlockSpec((n_rows, c_total), lambda i: (0, 0)),   # fused conv weight
            pl.BlockSpec((1, c_total), lambda i: (0, 0)),        # fused conv bias
            pl.BlockSpec((c_total, 2), lambda i: (0, 0)),        # decoder weight
            pl.BlockSpec((1, 2), lambda i: (0, 0)),              # decoder bias
        ],
        out_specs=pl.BlockSpec((bt, 2), lambda i: (i, 0)),
        compiler_params=pltpu.CompilerParams(
            dimension_semantics=("parallel",),                   # v7x: shard over 2 TCs
            vmem_limit_bytes=32 * 1024 * 1024,                   # fits v5e/v6e/v7x scoped VMEM
        ),
        cost_estimate=pl.CostEstimate(
            flops=int(flops), transcendentals=0,
            bytes_accessed=int(bytes_accessed)),
    )(ids, table, w_fused, b_cat, dec_w, dec_b)
    return out[:B]


# ----------------------------- pure-JAX reference -----------------------------
def textcnn_ref(inputs, params):
    emb = jnp.concatenate(
        [params["embedding"][inputs], params["constant_embedding"][inputs]],
        axis=-1)                                                 # (B, L, 2E)
    x = jnp.transpose(emb, (0, 2, 1))                            # (B, 2E, L)  NCW
    encs = []
    for w, b in zip(params["conv_w"], params["conv_b"]):         # w: (C, 2E, k)
        y = jax.lax.conv_general_dilated(
            x, w, window_strides=(1,), padding="VALID",
            dimension_numbers=("NCH", "OIH", "NCH")) + b[None, :, None]
        encs.append(jnp.maximum(jnp.mean(y, axis=-1), 0.0))      # pool then relu
    enc = jnp.concatenate(encs, axis=1)
    return enc @ params["dec_w"].T + params["dec_b"]


# ------------------------------------ main -------------------------------------
if __name__ == "__main__":
    vocab_size = 50
    embed_size = 16
    kernel_sizes = (3, 4, 5)
    num_channels = (4, 4, 4)
    B, L = 2, 8
    D = 2 * embed_size

    key = jax.random.PRNGKey(0)
    ks = jax.random.split(key, 12)

    params = {
        "embedding": jax.random.normal(ks[0], (vocab_size, embed_size), jnp.float32) * 0.1,
        "constant_embedding": jax.random.normal(ks[1], (vocab_size, embed_size), jnp.float32) * 0.1,
        "conv_w": [jax.random.normal(ks[2 + i], (c, D, k), jnp.float32) * 0.1
                   for i, (c, k) in enumerate(zip(num_channels, kernel_sizes))],
        "conv_b": [jax.random.normal(ks[5 + i], (c,), jnp.float32) * 0.1
                   for i, c in enumerate(num_channels)],
        "dec_w": jax.random.normal(ks[8], (2, sum(num_channels)), jnp.float32) * 0.1,
        "dec_b": jax.random.normal(ks[9], (2,), jnp.float32) * 0.1,
    }

    inputs = jax.random.randint(ks[10], (B, L), 0, vocab_size, dtype=jnp.int32)

    fwd = jax.jit(textcnn_forward)
    out = jax.block_until_ready(fwd(inputs, params))
    ref = jax.block_until_ready(textcnn_ref(inputs, params))

    # bf16 activation/weight path vs f32 reference -> bf16-appropriate tolerance.
    np.testing.assert_allclose(np.asarray(out), np.asarray(ref), rtol=2e-2, atol=2e-2)
    assert out.shape == (B, 2)
    print("KERNEL_OK")
</pallas_src>

<mosaic_0001>
module attributes {stable_mosaic.version = 11 : i64} {
  func.func @textcnn_kernel(%arg0: i32, %arg1: memref<8x8xi32, #tpu.memory_space<vmem>>, %arg2: memref<56x32xbf16, #tpu.memory_space<vmem>>, %arg3: memref<288x12xbf16, #tpu.memory_space<vmem>>, %arg4: memref<1x12xf32, #tpu.memory_space<vmem>>, %arg5: memref<12x2xf32, #tpu.memory_space<vmem>>, %arg6: memref<1x2xf32, #tpu.memory_space<vmem>>, %arg7: memref<8x2xf32, #tpu.memory_space<vmem>>) attributes {dimension_semantics = [#tpu.dimension_semantics<parallel>], iteration_bounds = array<i64: 1>, scalar_prefetch = 0 : i64, scratch_operands = 0 : i64, tpu.core_type = #tpu.core_type<tc>, window_params = [{transform_indices = @transform_0, window_bounds = array<i64: 8, 8>}, {pipeline_mode = #tpu.pipeline_mode<synchronous>, transform_indices = @transform_1, window_bounds = array<i64: 56, 32>}, {pipeline_mode = #tpu.pipeline_mode<synchronous>, transform_indices = @transform_2, window_bounds = array<i64: 288, 12>}, {pipeline_mode = #tpu.pipeline_mode<synchronous>, transform_indices = @transform_3, window_bounds = array<i64: 1, 12>}, {pipeline_mode = #tpu.pipeline_mode<synchronous>, transform_indices = @transform_4, window_bounds = array<i64: 12, 2>}, {pipeline_mode = #tpu.pipeline_mode<synchronous>, transform_indices = @transform_5, window_bounds = array<i64: 1, 2>}, {transform_indices = @transform_6, window_bounds = array<i64: 8, 2>}]} {
    %c0 = arith.constant 0 : index
    %c0_0 = arith.constant 0 : index
    %0 = vector.load %arg1[%c0, %c0_0] : memref<8x8xi32, #tpu.memory_space<vmem>>, vector<8x8xi32>
    %c0_1 = arith.constant 0 : index
    %c0_2 = arith.constant 0 : index
    %1 = vector.load %arg2[%c0_1, %c0_2] : memref<56x32xbf16, #tpu.memory_space<vmem>>, vector<56x32xbf16>
    %2 = tpu.iota {dimensions = array<i32: 1>} : vector<8x56xi32>
    %3 = vector.extract_strided_slice %0 {offsets = [0, 0], sizes = [8, 1], strides = [1, 1]} : vector<8x8xi32> to vector<8x1xi32>
    %4 = vector.broadcast %3 : vector<8x1xi32> to vector<8x56xi32>
    %5 = arith.cmpi eq, %4, %2 : vector<8x56xi32>
    %6 = arith.extui %5 : vector<8x56xi1> to vector<8x56xi32>
    %7 = arith.sitofp %6 : vector<8x56xi32> to vector<8x56xf32>
    %8 = arith.truncf %7 : vector<8x56xf32> to vector<8x56xbf16>
    %cst = arith.constant dense<0.000000e+00> : vector<8x32xf32>
    %9 = tpu.matmul %8, %1, %cst {dimension_numbers = #tpu.dot_dimension_numbers<[1], [0], [0], [1], [0, 0, 1, 1], [], []>} : vector<8x56xbf16>, vector<56x32xbf16>, vector<8x32xf32> -> vector<8x32xf32>
    %10 = vector.extract_strided_slice %0 {offsets = [0, 1], sizes = [8, 1], strides = [1, 1]} : vector<8x8xi32> to vector<8x1xi32>
    %11 = vector.broadcast %10 : vector<8x1xi32> to vector<8x56xi32>
    %12 = arith.cmpi eq, %11, %2 : vector<8x56xi32>
    %13 = arith.extui %12 : vector<8x56xi1> to vector<8x56xi32>
    %14 = arith.sitofp %13 : vector<8x56xi32> to vector<8x56xf32>
    %15 = arith.truncf %14 : vector<8x56xf32> to vector<8x56xbf16>
    %cst_3 = arith.constant dense<0.000000e+00> : vector<8x32xf32>
    %16 = tpu.matmul %15, %1, %cst_3 {dimension_numbers = #tpu.dot_dimension_numbers<[1], [0], [0], [1], [0, 0, 1, 1], [], []>} : vector<8x56xbf16>, vector<56x32xbf16>, vector<8x32xf32> -> vector<8x32xf32>
    %17 = vector.extract_strided_slice %0 {offsets = [0, 2], sizes = [8, 1], strides = [1, 1]} : vector<8x8xi32> to vector<8x1xi32>
    %18 = vector.broadcast %17 : vector<8x1xi32> to vector<8x56xi32>
    %19 = arith.cmpi eq, %18, %2 : vector<8x56xi32>
    %20 = arith.extui %19 : vector<8x56xi1> to vector<8x56xi32>
    %21 = arith.sitofp %20 : vector<8x56xi32> to vector<8x56xf32>
    %22 = arith.truncf %21 : vector<8x56xf32> to vector<8x56xbf16>
    %cst_4 = arith.constant dense<0.000000e+00> : vector<8x32xf32>
    %23 = tpu.matmul %22, %1, %cst_4 {dimension_numbers = #tpu.dot_dimension_numbers<[1], [0], [0], [1], [0, 0, 1, 1], [], []>} : vector<8x56xbf16>, vector<56x32xbf16>, vector<8x32xf32> -> vector<8x32xf32>
    %24 = vector.extract_strided_slice %0 {offsets = [0, 3], sizes = [8, 1], strides = [1, 1]} : vector<8x8xi32> to vector<8x1xi32>
    %25 = vector.broadcast %24 : vector<8x1xi32> to vector<8x56xi32>
    %26 = arith.cmpi eq, %25, %2 : vector<8x56xi32>
    %27 = arith.extui %26 : vector<8x56xi1> to vector<8x56xi32>
    %28 = arith.sitofp %27 : vector<8x56xi32> to vector<8x56xf32>
    %29 = arith.truncf %28 : vector<8x56xf32> to vector<8x56xbf16>
    %cst_5 = arith.constant dense<0.000000e+00> : vector<8x32xf32>
    %30 = tpu.matmul %29, %1, %cst_5 {dimension_numbers = #tpu.dot_dimension_numbers<[1], [0], [0], [1], [0, 0, 1, 1], [], []>} : vector<8x56xbf16>, vector<56x32xbf16>, vector<8x32xf32> -> vector<8x32xf32>
    %31 = vector.extract_strided_slice %0 {offsets = [0, 4], sizes = [8, 1], strides = [1, 1]} : vector<8x8xi32> to vector<8x1xi32>
    %32 = vector.broadcast %31 : vector<8x1xi32> to vector<8x56xi32>
    %33 = arith.cmpi eq, %32, %2 : vector<8x56xi32>
    %34 = arith.extui %33 : vector<8x56xi1> to vector<8x56xi32>
    %35 = arith.sitofp %34 : vector<8x56xi32> to vector<8x56xf32>
    %36 = arith.truncf %35 : vector<8x56xf32> to vector<8x56xbf16>
    %cst_6 = arith.constant dense<0.000000e+00> : vector<8x32xf32>
    %37 = tpu.matmul %36, %1, %cst_6 {dimension_numbers = #tpu.dot_dimension_numbers<[1], [0], [0], [1], [0, 0, 1, 1], [], []>} : vector<8x56xbf16>, vector<56x32xbf16>, vector<8x32xf32> -> vector<8x32xf32>
    %38 = vector.extract_strided_slice %0 {offsets = [0, 5], sizes = [8, 1], strides = [1, 1]} : vector<8x8xi32> to vector<8x1xi32>
    %39 = vector.broadcast %38 : vector<8x1xi32> to vector<8x56xi32>
    %40 = arith.cmpi eq, %39, %2 : vector<8x56xi32>
    %41 = arith.extui %40 : vector<8x56xi1> to vector<8x56xi32>
    %42 = arith.sitofp %41 : vector<8x56xi32> to vector<8x56xf32>
    %43 = arith.truncf %42 : vector<8x56xf32> to vector<8x56xbf16>
    %cst_7 = arith.constant dense<0.000000e+00> : vector<8x32xf32>
    %44 = tpu.matmul %43, %1, %cst_7 {dimension_numbers = #tpu.dot_dimension_numbers<[1], [0], [0], [1], [0, 0, 1, 1], [], []>} : vector<8x56xbf16>, vector<56x32xbf16>, vector<8x32xf32> -> vector<8x32xf32>
    %45 = vector.extract_strided_slice %0 {offsets = [0, 6], sizes = [8, 1], strides = [1, 1]} : vector<8x8xi32> to vector<8x1xi32>
    %46 = vector.broadcast %45 : vector<8x1xi32> to vector<8x56xi32>
    %47 = arith.cmpi eq, %46, %2 : vector<8x56xi32>
    %48 = arith.extui %47 : vector<8x56xi1> to vector<8x56xi32>
    %49 = arith.sitofp %48 : vector<8x56xi32> to vector<8x56xf32>
    %50 = arith.truncf %49 : vector<8x56xf32> to vector<8x56xbf16>
    %cst_8 = arith.constant dense<0.000000e+00> : vector<8x32xf32>
    %51 = tpu.matmul %50, %1, %cst_8 {dimension_numbers = #tpu.dot_dimension_numbers<[1], [0], [0], [1], [0, 0, 1, 1], [], []>} : vector<8x56xbf16>, vector<56x32xbf16>, vector<8x32xf32> -> vector<8x32xf32>
    %52 = vector.extract_strided_slice %0 {offsets = [0, 7], sizes = [8, 1], strides = [1, 1]} : vector<8x8xi32> to vector<8x1xi32>
    %53 = vector.broadcast %52 : vector<8x1xi32> to vector<8x56xi32>
    %54 = arith.cmpi eq, %53, %2 : vector<8x56xi32>
    %55 = arith.extui %54 : vector<8x56xi1> to vector<8x56xi32>
    %56 = arith.sitofp %55 : vector<8x56xi32> to vector<8x56xf32>
    %57 = arith.truncf %56 : vector<8x56xf32> to vector<8x56xbf16>
    %cst_9 = arith.constant dense<0.000000e+00> : vector<8x32xf32>
    %58 = tpu.matmul %57, %1, %cst_9 {dimension_numbers = #tpu.dot_dimension_numbers<[1], [0], [0], [1], [0, 0, 1, 1], [], []>} : vector<8x56xbf16>, vector<56x32xbf16>, vector<8x32xf32> -> vector<8x32xf32>
    %59 = arith.addf %9, %16 : vector<8x32xf32>
    %60 = arith.addf %59, %23 : vector<8x32xf32>
    %61 = arith.addf %60, %30 : vector<8x32xf32>
    %62 = arith.addf %61, %37 : vector<8x32xf32>
    %63 = arith.addf %62, %44 : vector<8x32xf32>
    %64 = arith.addf %63, %51 : vector<8x32xf32>
    %65 = arith.addf %64, %58 : vector<8x32xf32>
    %66 = tpu.concatenate %65, %9, %16, %23, %30, %37, %44, %51, %58 in 1 : vector<8x32xf32>, vector<8x32xf32>, vector<8x32xf32>, vector<8x32xf32>, vector<8x32xf32>, vector<8x32xf32>, vector<8x32xf32>, vector<8x32xf32>, vector<8x32xf32> -> vector<8x288xf32>
    %67 = arith.truncf %66 : vector<8x288xf32> to vector<8x288xbf16>
    %c0_10 = arith.constant 0 : index
    %c0_11 = arith.constant 0 : index
    %68 = vector.load %arg3[%c0_10, %c0_11] : memref<288x12xbf16, #tpu.memory_space<vmem>>, vector<288x12xbf16>
    %cst_12 = arith.constant dense<0.000000e+00> : vector<8x12xf32>
    %69 = tpu.matmul %67, %68, %cst_12 {dimension_numbers = #tpu.dot_dimension_numbers<[1], [0], [0], [1], [0, 0, 1, 1], [], []>} : vector<8x288xbf16>, vector<288x12xbf16>, vector<8x12xf32> -> vector<8x12xf32>
    %c0_13 = arith.constant 0 : index
    %c0_14 = arith.constant 0 : index
    %70 = vector.load %arg4[%c0_13, %c0_14] : memref<1x12xf32, #tpu.memory_space<vmem>>, vector<1x12xf32>
    %71 = vector.broadcast %70 : vector<1x12xf32> to vector<8x12xf32>
    %72 = arith.addf %69, %71 : vector<8x12xf32>
    %cst_15 = arith.constant 0.000000e+00 : f32
    %73 = vector.broadcast %cst_15 : f32 to vector<8x12xf32>
    %74 = arith.maximumf %72, %73 : vector<8x12xf32>
    %c0_16 = arith.constant 0 : index
    %c0_17 = arith.constant 0 : index
    %75 = vector.load %arg5[%c0_16, %c0_17] : memref<12x2xf32, #tpu.memory_space<vmem>>, vector<12x2xf32>
    %cst_18 = arith.constant dense<0.000000e+00> : vector<8x2xf32>
    %76 = tpu.matmul %74, %75, %cst_18 {dimension_numbers = #tpu.dot_dimension_numbers<[1], [0], [0], [1], [0, 0, 1, 1], [], []>} : vector<8x12xf32>, vector<12x2xf32>, vector<8x2xf32> -> vector<8x2xf32>
    %c0_19 = arith.constant 0 : index
    %c0_20 = arith.constant 0 : index
    %77 = vector.load %arg6[%c0_19, %c0_20] : memref<1x2xf32, #tpu.memory_space<vmem>>, vector<1x2xf32>
    %78 = vector.broadcast %77 : vector<1x2xf32> to vector<8x2xf32>
    %79 = arith.addf %76, %78 : vector<8x2xf32>
    %c0_21 = arith.constant 0 : index
    %c0_22 = arith.constant 0 : index
    %80 = vector.load %arg7[%c0_21, %c0_22] : memref<8x2xf32, #tpu.memory_space<vmem>>, vector<8x2xf32>
    tpu.vector_store %arg7[%c0_21, %c0_22], %79 {strides = array<i32>} : memref<8x2xf32, #tpu.memory_space<vmem>>, vector<8x2xf32>,
    return
  }
  func.func @transform_0(%arg0: i32) -> (i32, i32) {
    %c0_i32 = arith.constant 0 : i32
    %c0_i32_0 = arith.constant 0 : i32
    return %arg0, %c0_i32 : i32, i32
  }
  func.func @transform_1(%arg0: i32) -> (i32, i32) {
    %c0_i32 = arith.constant 0 : i32
    %c0_i32_0 = arith.constant 0 : i32
    %c0_i32_1 = arith.constant 0 : i32
    return %c0_i32, %c0_i32_0 : i32, i32
  }
  func.func @transform_2(%arg0: i32) -> (i32, i32) {
    %c0_i32 = arith.constant 0 : i32
    %c0_i32_0 = arith.constant 0 : i32
    %c0_i32_1 = arith.constant 0 : i32
    return %c0_i32, %c0_i32_0 : i32, i32
  }
  func.func @transform_3(%arg0: i32) -> (i32, i32) {
    %c0_i32 = arith.constant 0 : i32
    %c0_i32_0 = arith.constant 0 : i32
    %c0_i32_1 = arith.constant 0 : i32
    return %c0_i32, %c0_i32_0 : i32, i32
  }
  func.func @transform_4(%arg0: i32) -> (i32, i32) {
    %c0_i32 = arith.constant 0 : i32
    %c0_i32_0 = arith.constant 0 : i32
    %c0_i32_1 = arith.constant 0 : i32
    return %c0_i32, %c0_i32_0 : i32, i32
  }
  func.func @transform_5(%arg0: i32) -> (i32, i32) {
    %c0_i32 = arith.constant 0 : i32
    %c0_i32_0 = arith.constant 0 : i32
    %c0_i32_1 = arith.constant 0 : i32
    return %c0_i32, %c0_i32_0 : i32, i32
  }
  func.func @transform_6(%arg0: i32) -> (i32, i32) {
    %c0_i32 = arith.constant 0 : i32
    %c0_i32_0 = arith.constant 0 : i32
    return %arg0, %c0_i32 : i32, i32
  }
}

</mosaic_0001>

<llo_original>
// kernel: textcnn_forward.1
$region0: #{textcnn_forward.1}
  #allocation0 [shape = 'u32[]', space=smem, size = 0x4, offset = 0x4, fixed_abs, tag = 'smem constant byte address 0x4 - core index']
  #allocation1 [shape = 'u32[144,128]{1,0:T(1,128)}', space=vmem, size = 0x12000, scoped, tag = 'internal scratch']
  %s0 = inlined_call_operand.vmem [shape: s32[8,8], index: 0, kind: input, shape index: {}]
  %s1 = inlined_call_operand.vmem [shape: bf16[56,32], index: 1, kind: input, shape index: {}]
  %s2 = inlined_call_operand.vmem [shape: bf16[288,12], index: 2, kind: input, shape index: {}]
  %s3 = inlined_call_operand.vmem [shape: f32[1,12], index: 3, kind: input, shape index: {}]
  %s4 = inlined_call_operand.vmem [shape: f32[12,2], index: 4, kind: input, shape index: {}]
  %s5 = inlined_call_operand.vmem [shape: f32[1,2], index: 5, kind: input, shape index: {}]
  %s6 = inlined_call_operand.vmem [shape: f32[8,2], index: 6, kind: output, shape index: {}]
  %s7 = sld [smem:[#allocation0]]
  $region34: #{textcnn_forward.1} parent=0
    _
  %s9 = ssub.s32 1, %s7
  %s10 = scalar_select 0, %s9, %s7
  // Predicated region
  $region2: #{textcnn_forward.1} parent=0 // pred_check
    _
  $region3: #{textcnn_forward.1} parent=0 // pred_check_branch
    %12 = sbr.rel (0) target = $region5
  $region4: #{textcnn_forward.1} parent=0 // pred_region
    _
  $region5: #{textcnn_forward.1} parent=0 // pred_fallthru
    _
  // Predicated region
  $region6: #{textcnn_forward.1} parent=0 // pred_check
    _
  $region7: #{textcnn_forward.1} parent=0 // pred_check_branch
    %14 = sbr.rel (0) target = $region9
  $region8: #{textcnn_forward.1} parent=0 // pred_region
    _
  $region9: #{textcnn_forward.1} parent=0 // pred_fallthru
    _
  // Predicated region
  $region10: #{textcnn_forward.1} parent=0 // pred_check
    _
  $region11: #{textcnn_forward.1} parent=0 // pred_check_branch
    %16 = sbr.rel (0) target = $region13
  $region12: #{textcnn_forward.1} parent=0 // pred_region
    _
  $region13: #{textcnn_forward.1} parent=0 // pred_fallthru
    _
  // Predicated region
  $region14: #{textcnn_forward.1} parent=0 // pred_check
    _
  $region15: #{textcnn_forward.1} parent=0 // pred_check_branch
    %18 = sbr.rel (0) target = $region17
  $region16: #{textcnn_forward.1} parent=0 // pred_region
    _
  $region17: #{textcnn_forward.1} parent=0 // pred_fallthru
    _
  // Predicated region
  $region18: #{textcnn_forward.1} parent=0 // pred_check
    _
  $region19: #{textcnn_forward.1} parent=0 // pred_check_branch
    %20 = sbr.rel (0) target = $region21
  $region20: #{textcnn_forward.1} parent=0 // pred_region
    _
  $region21: #{textcnn_forward.1} parent=0 // pred_fallthru
    _
  // Predicated region
  $region22: #{textcnn_forward.1} parent=0 // pred_check
    _
  $region23: #{textcnn_forward.1} parent=0 // pred_check_branch
    %22 = sbr.rel (0) target = $region25
  $region24: #{textcnn_forward.1} parent=0 // pred_region
    _
  $region25: #{textcnn_forward.1} parent=0 // pred_fallthru
    _
  %v24 = vld [vmem:[%s0] sm:$0xff]
  %v25 = vld [vmem:[%s1] sm:$0xf]
  %v26 = vld [vmem:[%s1 + $0x4] sm:$0xf]
  %v27 = vld [vmem:[%s1 + $0x8] sm:$0xf]
  %v28 = vld [vmem:[%s1 + $0xc] sm:$0xf]
  %v29 = vld [vmem:[%s1 + $0x10] sm:$0xf]
  %v30 = vld [vmem:[%s1 + $0x14] sm:$0xf]
  %v31 = vld [vmem:[%s1 + $0x18] sm:$0xf]
  %v32 = vlaneseq
  %v33 = vand.u32 %v32, 127
  %34 = vset.pattern.permute.xlu0 0
  %35 = vperm.xlu0 %34, %v24
  %v36 = vpop.permute.xlu0 %35
  %vm37 = vcmp.eq.s32.totalorder %v36, %v33
  %v38 = vsel %vm37, 1, 0
  %v39 = vcvt.s32.f32 %v38
  %v40 = vpack.c.bf16 %v39, %v39
  %v48 = vunpack.c.l.b16 %v25
  %v49 = vunpack.c.l.b16 %v26
  %v50 = vunpack.c.l.b16 %v27
  %v51 = vunpack.c.l.b16 %v28
  %v52 = vunpack.c.l.b16 %v29
  %v53 = vunpack.c.l.b16 %v30
  %v54 = vunpack.c.l.b16 %v31
  %v55 = vpack.c.b16 %v49, %v48
  %v56 = vpack.c.b16 %v51, %v50
  %v57 = vpack.c.b16 %v53, %v52
  %v58 = vpack.c.b16 %v54, %v54
  %vm62 = vcmask 457728
  %v64 = vsel %vm62, %v40, 0
  %vm66 = vcmask 1043456
  %v68 = vsel %vm66, %v58, 0
  %70 = vmatprep.subr.bf16.mxu0 0
  %71 = vmatpush1.bf16.msra.mxu0 %v55
  %72 = vmatprep.subr.bf16.mxu0 0
  %73 = vmatpush1.bf16.msra.mxu0 %v56
  %74 = vmatprep.subr.bf16.mxu0 0
  %75 = vmatpush1.bf16.msra.mxu0 %v57
  %76 = vmatprep.subr.bf16.mxu0 0
  %77 = vmatpush1.bf16.msra.mxu0 %v68
  %78 = vmatprep.subr.bf16.mxu0 0
  %79 = vmatpush1.bf16.msra.mxu0 0
  %80 = vmatprep.subr.bf16.mxu0 0
  %81 = vmatpush1.bf16.msra.mxu0 0
  %82 = vmatprep.subr.bf16.mxu0 0
  %83 = vmatpush1.bf16.msra.mxu0 0
  %84 = vmatprep.subr.bf16.mxu0 0
  %85 = vmatpush1.bf16.msra.mxu0 0
  %86 = vmatprep.subr.bf16.mxu0 0
  %87 = vmatpush1.bf16.msra.mxu0 0
  %88 = vmatprep.subr.bf16.mxu0 0
  %89 = vmatpush1.bf16.msra.mxu0 0
  %90 = vmatprep.subr.bf16.mxu0 0
  %91 = vmatpush1.bf16.msra.mxu0 0
  %92 = vmatprep.subr.bf16.mxu0 0
  %93 = vmatpush1.bf16.msra.mxu0 0
  %94 = vmatprep.subr.bf16.mxu0 0
  %95 = vmatpush1.bf16.msra.mxu0 0
  %96 = vmatprep.subr.bf16.mxu0 0
  %97 = vmatpush1.bf16.msra.mxu0 0
  %98 = vmatprep.subr.bf16.mxu0 0
  %99 = vmatpush1.bf16.msra.mxu0 0
  %100 = vmatprep.subr.bf16.mxu0 0
  %101 = vmatpush1.bf16.msra.mxu0 0
  %102 = vmatprep.mubr.bf16.mxu0 0
  %103 = vmatmul.mubr.bf16.gmra.mrb[0].mxu0 %v64
  %v104 = vpop.f32.mrb[0].mxu0
  %v105 = vadd.f32 0.0, %v104
  %v106 = vpop.f32.mrb[0].mxu0
  %v107 = vpop.f32.mrb[0].mxu0
  %v108 = vpop.f32.mrb[0].mxu0
  %109 = vdwg.mxu0
  %110 = vset.pattern.permute.xlu0 1
  %111 = vperm.xlu0 %110, %v24
  %v112 = vpop.permute.xlu0 %111
  %vm113 = vcmp.eq.s32.totalorder %v112, %v33
  %v114 = vsel %vm113, 1, 0
  %v115 = vcvt.s32.f32 %v114
  %v116 = vpack.c.bf16 %v115, %v115
  %v118 = vsel %vm62, %v116, 0
  %120 = vmatprep.subr.bf16.mxu0 0
  %121 = vmatpush1.bf16.msra.mxu0 %v55
  %122 = vmatprep.subr.bf16.mxu0 0
  %123 = vmatpush1.bf16.msra.mxu0 %v56
  %124 = vmatprep.subr.bf16.mxu0 0
  %125 = vmatpush1.bf16.msra.mxu0 %v57
  %126 = vmatprep.subr.bf16.mxu0 0
  %127 = vmatpush1.bf16.msra.mxu0 %v68
  %128 = vmatprep.subr.bf16.mxu0 0
  %129 = vmatpush1.bf16.msra.mxu0 0
  %130 = vmatprep.subr.bf16.mxu0 0
  %131 = vmatpush1.bf16.msra.mxu0 0
  %132 = vmatprep.subr.bf16.mxu0 0
  %133 = vmatpush1.bf16.msra.mxu0 0
  %134 = vmatprep.subr.bf16.mxu0 0
  %135 = vmatpush1.bf16.msra.mxu0 0
  %136 = vmatprep.subr.bf16.mxu0 0
  %137 = vmatpush1.bf16.msra.mxu0 0
  %138 = vmatprep.subr.bf16.mxu0 0
  %139 = vmatpush1.bf16.msra.mxu0 0
  %140 = vmatprep.subr.bf16.mxu0 0
  %141 = vmatpush1.bf16.msra.mxu0 0
  %142 = vmatprep.subr.bf16.mxu0 0
  %143 = vmatpush1.bf16.msra.mxu0 0
  %144 = vmatprep.subr.bf16.mxu0 0
  %145 = vmatpush1.bf16.msra.mxu0 0
  %146 = vmatprep.subr.bf16.mxu0 0
  %147 = vmatpush1.bf16.msra.mxu0 0
  %148 = vmatprep.subr.bf16.mxu0 0
  %149 = vmatpush1.bf16.msra.mxu0 0
  %150 = vmatprep.subr.bf16.mxu0 0
  %151 = vmatpush1.bf16.msra.mxu0 0
  %152 = vmatprep.mubr.bf16.mxu0 0
  %153 = vmatmul.mubr.bf16.gmra.mrb[0].mxu0 %v118
  %v154 = vpop.f32.mrb[0].mxu0
  %v155 = vadd.f32 0.0, %v154
  %v156 = vpop.f32.mrb[0].mxu0
  %v157 = vpop.f32.mrb[0].mxu0
  %v158 = vpop.f32.mrb[0].mxu0
  %159 = vdwg.mxu0
  %160 = vset.pattern.permute.xlu0 2
  %161 = vperm.xlu0 %160, %v24
  %v162 = vpop.permute.xlu0 %161
  %vm163 = vcmp.eq.s32.totalorder %v162, %v33
  %v164 = vsel %vm163, 1, 0
  %v165 = vcvt.s32.f32 %v164
  %v166 = vpack.c.bf16 %v165, %v165
  %v168 = vsel %vm62, %v166, 0
  %170 = vmatprep.subr.bf16.mxu0 0
  %171 = vmatpush1.bf16.msra.mxu0 %v55
  %172 = vmatprep.subr.bf16.mxu0 0
  %173 = vmatpush1.bf16.msra.mxu0 %v56
  %174 = vmatprep.subr.bf16.mxu0 0
  %175 = vmatpush1.bf16.msra.mxu0 %v57
  %176 = vmatprep.subr.bf16.mxu0 0
  %177 = vmatpush1.bf16.msra.mxu0 %v68
  %178 = vmatprep.subr.bf16.mxu0 0
  %179 = vmatpush1.bf16.msra.mxu0 0
  %180 = vmatprep.subr.bf16.mxu0 0
  %181 = vmatpush1.bf16.msra.mxu0 0
  %182 = vmatprep.subr.bf16.mxu0 0
  %183 = vmatpush1.bf16.msra.mxu0 0
  %184 = vmatprep.subr.bf16.mxu0 0
  %185 = vmatpush1.bf16.msra.mxu0 0
  %186 = vmatprep.subr.bf16.mxu0 0
  %187 = vmatpush1.bf16.msra.mxu0 0
  %188 = vmatprep.subr.bf16.mxu0 0
  %189 = vmatpush1.bf16.msra.mxu0 0
  %190 = vmatprep.subr.bf16.mxu0 0
  %191 = vmatpush1.bf16.msra.mxu0 0
  %192 = vmatprep.subr.bf16.mxu0 0
  %193 = vmatpush1.bf16.msra.mxu0 0
  %194 = vmatprep.subr.bf16.mxu0 0
  %195 = vmatpush1.bf16.msra.mxu0 0
  %196 = vmatprep.subr.bf16.mxu0 0
  %197 = vmatpush1.bf16.msra.mxu0 0
  %198 = vmatprep.subr.bf16.mxu0 0
  %199 = vmatpush1.bf16.msra.mxu0 0
  %200 = vmatprep.subr.bf16.mxu0 0
  %201 = vmatpush1.bf16.msra.mxu0 0
  %202 = vmatprep.mubr.bf16.mxu0 0
  %203 = vmatmul.mubr.bf16.gmra.mrb[0].mxu0 %v168
  %v204 = vpop.f32.mrb[0].mxu0
  %v205 = vadd.f32 0.0, %v204
  %v206 = vpop.f32.mrb[0].mxu0
  %v207 = vpop.f32.mrb[0].mxu0
  %v208 = vpop.f32.mrb[0].mxu0
  %209 = vdwg.mxu0
  %210 = vset.pattern.permute.xlu0 3
  %211 = vperm.xlu0 %210, %v24
  %v212 = vpop.permute.xlu0 %211
  %vm213 = vcmp.eq.s32.totalorder %v212, %v33
  %v214 = vsel %vm213, 1, 0
  %v215 = vcvt.s32.f32 %v214
  %v216 = vpack.c.bf16 %v215, %v215
  %v218 = vsel %vm62, %v216, 0
  %220 = vmatprep.subr.bf16.mxu0 0
  %221 = vmatpush1.bf16.msra.mxu0 %v55
  %222 = vmatprep.subr.bf16.mxu0 0
  %223 = vmatpush1.bf16.msra.mxu0 %v56
  %224 = vmatprep.subr.bf16.mxu0 0
  %225 = vmatpush1.bf16.msra.mxu0 %v57
  %226 = vmatprep.subr.bf16.mxu0 0
  %227 = vmatpush1.bf16.msra.mxu0 %v68
  %228 = vmatprep.subr.bf16.mxu0 0
  %229 = vmatpush1.bf16.msra.mxu0 0
  %230 = vmatprep.subr.bf16.mxu0 0
  %231 = vmatpush1.bf16.msra.mxu0 0
  %232 = vmatprep.subr.bf16.mxu0 0
  %233 = vmatpush1.bf16.msra.mxu0 0
  %234 = vmatprep.subr.bf16.mxu0 0
  %235 = vmatpush1.bf16.msra.mxu0 0
  %236 = vmatprep.subr.bf16.mxu0 0
  %237 = vmatpush1.bf16.msra.mxu0 0
  %238 = vmatprep.subr.bf16.mxu0 0
  %239 = vmatpush1.bf16.msra.mxu0 0
  %240 = vmatprep.subr.bf16.mxu0 0
  %241 = vmatpush1.bf16.msra.mxu0 0
  %242 = vmatprep.subr.bf16.mxu0 0
  %243 = vmatpush1.bf16.msra.mxu0 0
  %244 = vmatprep.subr.bf16.mxu0 0
  %245 = vmatpush1.bf16.msra.mxu0 0
  %246 = vmatprep.subr.bf16.mxu0 0
  %247 = vmatpush1.bf16.msra.mxu0 0
  %248 = vmatprep.subr.bf16.mxu0 0
  %249 = vmatpush1.bf16.msra.mxu0 0
  %250 = vmatprep.subr.bf16.mxu0 0
  %251 = vmatpush1.bf16.msra.mxu0 0
  %252 = vmatprep.mubr.bf16.mxu0 0
  %253 = vmatmul.mubr.bf16.gmra.mrb[0].mxu0 %v218
  %v254 = vpop.f32.mrb[0].mxu0
  %v255 = vadd.f32 0.0, %v254
  %v256 = vpop.f32.mrb[0].mxu0
  %v257 = vpop.f32.mrb[0].mxu0
  %v258 = vpop.f32.mrb[0].mxu0
  %259 = vdwg.mxu0
  %260 = vset.pattern.permute.xlu0 4
  %261 = vperm.xlu0 %260, %v24
  %v262 = vpop.permute.xlu0 %261
  %vm263 = vcmp.eq.s32.totalorder %v262, %v33
  %v264 = vsel %vm263, 1, 0
  %v265 = vcvt.s32.f32 %v264
  %v266 = vpack.c.bf16 %v265, %v265
  %v268 = vsel %vm62, %v266, 0
  %270 = vmatprep.subr.bf16.mxu0 0
  %271 = vmatpush1.bf16.msra.mxu0 %v55
  %272 = vmatprep.subr.bf16.mxu0 0
  %273 = vmatpush1.bf16.msra.mxu0 %v56
  %274 = vmatprep.subr.bf16.mxu0 0
  %275 = vmatpush1.bf16.msra.mxu0 %v57
  %276 = vmatprep.subr.bf16.mxu0 0
  %277 = vmatpush1.bf16.msra.mxu0 %v68
  %278 = vmatprep.subr.bf16.mxu0 0
  %279 = vmatpush1.bf16.msra.mxu0 0
  %280 = vmatprep.subr.bf16.mxu0 0
  %281 = vmatpush1.bf16.msra.mxu0 0
  %282 = vmatprep.subr.bf16.mxu0 0
  %283 = vmatpush1.bf16.msra.mxu0 0
  %284 = vmatprep.subr.bf16.mxu0 0
  %285 = vmatpush1.bf16.msra.mxu0 0
  %286 = vmatprep.subr.bf16.mxu0 0
  %287 = vmatpush1.bf16.msra.mxu0 0
  %288 = vmatprep.subr.bf16.mxu0 0
  %289 = vmatpush1.bf16.msra.mxu0 0
  %290 = vmatprep.subr.bf16.mxu0 0
  %291 = vmatpush1.bf16.msra.mxu0 0
  %292 = vmatprep.subr.bf16.mxu0 0
  %293 = vmatpush1.bf16.msra.mxu0 0
  %294 = vmatprep.subr.bf16.mxu0 0
  %295 = vmatpush1.bf16.msra.mxu0 0
  %296 = vmatprep.subr.bf16.mxu0 0
  %297 = vmatpush1.bf16.msra.mxu0 0
  %298 = vmatprep.subr.bf16.mxu0 0
  %299 = vmatpush1.bf16.msra.mxu0 0
  %300 = vmatprep.subr.bf16.mxu0 0
  %301 = vmatpush1.bf16.msra.mxu0 0
  %302 = vmatprep.mubr.bf16.mxu0 0
  %303 = vmatmul.mubr.bf16.gmra.mrb[0].mxu0 %v268
  %v304 = vpop.f32.mrb[0].mxu0
  %v305 = vadd.f32 0.0, %v304
  %v306 = vpop.f32.mrb[0].mxu0
  %v307 = vpop.f32.mrb[0].mxu0
  %v308 = vpop.f32.mrb[0].mxu0
  %309 = vdwg.mxu0
  %310 = vset.pattern.permute.xlu0 5
  %311 = vperm.xlu0 %310, %v24
  %v312 = vpop.permute.xlu0 %311
  %vm313 = vcmp.eq.s32.totalorder %v312, %v33
  %v314 = vsel %vm313, 1, 0
  %v315 = vcvt.s32.f32 %v314
  %v316 = vpack.c.bf16 %v315, %v315
  %v318 = vsel %vm62, %v316, 0
  %320 = vmatprep.subr.bf16.mxu0 0
  %321 = vmatpush1.bf16.msra.mxu0 %v55
  %322 = vmatprep.subr.bf16.mxu0 0
  %323 = vmatpush1.bf16.msra.mxu0 %v56
  %324 = vmatprep.subr.bf16.mxu0 0
  %325 = vmatpush1.bf16.msra.mxu0 %v57
  %326 = vmatprep.subr.bf16.mxu0 0
  %327 = vmatpush1.bf16.msra.mxu0 %v68
  %328 = vmatprep.subr.bf16.mxu0 0
  %329 = vmatpush1.bf16.msra.mxu0 0
  %330 = vmatprep.subr.bf16.mxu0 0
  %331 = vmatpush1.bf16.msra.mxu0 0
  %332 = vmatprep.subr.bf16.mxu0 0
  %333 = vmatpush1.bf16.msra.mxu0 0
  %334 = vmatprep.subr.bf16.mxu0 0
  %335 = vmatpush1.bf16.msra.mxu0 0
  %336 = vmatprep.subr.bf16.mxu0 0
  %337 = vmatpush1.bf16.msra.mxu0 0
  %338 = vmatprep.subr.bf16.mxu0 0
  %339 = vmatpush1.bf16.msra.mxu0 0
  %340 = vmatprep.subr.bf16.mxu0 0
  %341 = vmatpush1.bf16.msra.mxu0 0
  %342 = vmatprep.subr.bf16.mxu0 0
  %343 = vmatpush1.bf16.msra.mxu0 0
  %344 = vmatprep.subr.bf16.mxu0 0
  %345 = vmatpush1.bf16.msra.mxu0 0
  %346 = vmatprep.subr.bf16.mxu0 0
  %347 = vmatpush1.bf16.msra.mxu0 0
  %348 = vmatprep.subr.bf16.mxu0 0
  %349 = vmatpush1.bf16.msra.mxu0 0
  %350 = vmatprep.subr.bf16.mxu0 0
  %351 = vmatpush1.bf16.msra.mxu0 0
  %352 = vmatprep.mubr.bf16.mxu0 0
  %353 = vmatmul.mubr.bf16.gmra.mrb[0].mxu0 %v318
  %v354 = vpop.f32.mrb[0].mxu0
  %v355 = vadd.f32 0.0, %v354
  %v356 = vpop.f32.mrb[0].mxu0
  %v357 = vpop.f32.mrb[0].mxu0
  %v358 = vpop.f32.mrb[0].mxu0
  %359 = vdwg.mxu0
  %360 = vset.pattern.permute.xlu0 6
  %361 = vperm.xlu0 %360, %v24
  %v362 = vpop.permute.xlu0 %361
  %vm363 = vcmp.eq.s32.totalorder %v362, %v33
  %v364 = vsel %vm363, 1, 0
  %v365 = vcvt.s32.f32 %v364
  %v366 = vpack.c.bf16 %v365, %v365
  %v368 = vsel %vm62, %v366, 0
  %370 = vmatprep.subr.bf16.mxu0 0
  %371 = vmatpush1.bf16.msra.mxu0 %v55
  %372 = vmatprep.subr.bf16.mxu0 0
  %373 = vmatpush1.bf16.msra.mxu0 %v56
  %374 = vmatprep.subr.bf16.mxu0 0
  %375 = vmatpush1.bf16.msra.mxu0 %v57
  %376 = vmatprep.subr.bf16.mxu0 0
  %377 = vmatpush1.bf16.msra.mxu0 %v68
  %378 = vmatprep.subr.bf16.mxu0 0
  %379 = vmatpush1.bf16.msra.mxu0 0
  %380 = vmatprep.subr.bf16.mxu0 0
  %381 = vmatpush1.bf16.msra.mxu0 0
  %382 = vmatprep.subr.bf16.mxu0 0
  %383 = vmatpush1.bf16.msra.mxu0 0
  %384 = vmatprep.subr.bf16.mxu0 0
  %385 = vmatpush1.bf16.msra.mxu0 0
  %386 = vmatprep.subr.bf16.mxu0 0
  %387 = vmatpush1.bf16.msra.mxu0 0
  %388 = vmatprep.subr.bf16.mxu0 0
  %389 = vmatpush1.bf16.msra.mxu0 0
  %390 = vmatprep.subr.bf16.mxu0 0
  %391 = vmatpush1.bf16.msra.mxu0 0
  %392 = vmatprep.subr.bf16.mxu0 0
  %393 = vmatpush1.bf16.msra.mxu0 0
  %394 = vmatprep.subr.bf16.mxu0 0
  %395 = vmatpush1.bf16.msra.mxu0 0
  %396 = vmatprep.subr.bf16.mxu0 0
  %397 = vmatpush1.bf16.msra.mxu0 0
  %398 = vmatprep.subr.bf16.mxu0 0
  %399 = vmatpush1.bf16.msra.mxu0 0
  %400 = vmatprep.subr.bf16.mxu0 0
  %401 = vmatpush1.bf16.msra.mxu0 0
  %402 = vmatprep.mubr.bf16.mxu0 0
  %403 = vmatmul.mubr.bf16.gmra.mrb[0].mxu0 %v368
  %v404 = vpop.f32.mrb[0].mxu0
  %v405 = vadd.f32 0.0, %v404
  %v406 = vpop.f32.mrb[0].mxu0
  %v407 = vpop.f32.mrb[0].mxu0
  %v408 = vpop.f32.mrb[0].mxu0
  %409 = vdwg.mxu0
  %410 = vset.pattern.permute.xlu0 7
  %411 = vperm.xlu0 %410, %v24
  %v412 = vpop.permute.xlu0 %411
  %vm413 = vcmp.eq.s32.totalorder %v412, %v33
  %v414 = vsel %vm413, 1, 0
  %v415 = vcvt.s32.f32 %v414
  %v416 = vpack.c.bf16 %v415, %v415
  %v418 = vsel %vm62, %v416, 0
  %420 = vmatprep.subr.bf16.mxu0 0
  %421 = vmatpush1.bf16.msra.mxu0 %v55
  %422 = vmatprep.subr.bf16.mxu0 0
  %423 = vmatpush1.bf16.msra.mxu0 %v56
  %424 = vmatprep.subr.bf16.mxu0 0
  %425 = vmatpush1.bf16.msra.mxu0 %v57
  %426 = vmatprep.subr.bf16.mxu0 0
  %427 = vmatpush1.bf16.msra.mxu0 %v68
  %428 = vmatprep.subr.bf16.mxu0 0
  %429 = vmatpush1.bf16.msra.mxu0 0
  %430 = vmatprep.subr.bf16.mxu0 0
  %431 = vmatpush1.bf16.msra.mxu0 0
  %432 = vmatprep.subr.bf16.mxu0 0
  %433 = vmatpush1.bf16.msra.mxu0 0
  %434 = vmatprep.subr.bf16.mxu0 0
  %435 = vmatpush1.bf16.msra.mxu0 0
  %436 = vmatprep.subr.bf16.mxu0 0
  %437 = vmatpush1.bf16.msra.mxu0 0
  %438 = vmatprep.subr.bf16.mxu0 0
  %439 = vmatpush1.bf16.msra.mxu0 0
  %440 = vmatprep.subr.bf16.mxu0 0
  %441 = vmatpush1.bf16.msra.mxu0 0
  %442 = vmatprep.subr.bf16.mxu0 0
  %443 = vmatpush1.bf16.msra.mxu0 0
  %444 = vmatprep.subr.bf16.mxu0 0
  %445 = vmatpush1.bf16.msra.mxu0 0
  %446 = vmatprep.subr.bf16.mxu0 0
  %447 = vmatpush1.bf16.msra.mxu0 0
  %448 = vmatprep.subr.bf16.mxu0 0
  %449 = vmatpush1.bf16.msra.mxu0 0
  %450 = vmatprep.subr.bf16.mxu0 0
  %451 = vmatpush1.bf16.msra.mxu0 0
  %452 = vmatprep.mubr.bf16.mxu0 0
  %453 = vmatmul.mubr.bf16.gmra.mrb[0].mxu0 %v418
  %v454 = vpop.f32.mrb[0].mxu0
  %v455 = vadd.f32 0.0, %v454
  %v456 = vpop.f32.mrb[0].mxu0
  %v457 = vpop.f32.mrb[0].mxu0
  %v458 = vpop.f32.mrb[0].mxu0
  %459 = vdwg.mxu0
  %v460 = vadd.f32 %v105, %v155
  %v461 = vadd.f32 %v460, %v205
  %v462 = vadd.f32 %v461, %v255
  %v463 = vadd.f32 %v462, %v305
  %v464 = vadd.f32 %v463, %v355
  %v465 = vadd.f32 %v464, %v405
  %v466 = vadd.f32 %v465, %v455
  %468 = vrot.lane.b32.xlu0 %v105, 32
  %v469 = vpop.permute.xlu0 %468
  %472 = vrot.lane.b32.xlu0 %v155, 64
  %v473 = vpop.permute.xlu0 %472
  %476 = vrot.lane.b32.xlu0 %v205, 96
  %v477 = vpop.permute.xlu0 %476
  %480 = vrot.lane.b32.xlu0 %v305, 32
  %v481 = vpop.permute.xlu0 %480
  %484 = vrot.lane.b32.xlu0 %v355, 64
  %v485 = vpop.permute.xlu0 %484
  %488 = vrot.lane.b32.xlu0 %v405, 96
  %v489 = vpop.permute.xlu0 %488
  %vm491 = vcmask 261120
  %v492 = vsel %vm491, %v466, %v469
  %vm493 = vcmask 523264
  %v494 = vsel %vm493, %v492, %v473
  %vm495 = vcmask 785408
  %v496 = vsel %vm495, %v494, %v477
  %v497 = vsel %vm491, %v255, %v481
  %v498 = vsel %vm493, %v497, %v485
  %v499 = vsel %vm495, %v498, %v489
  %v500 = vpack.c.bf16 %v496, %v496
  %v501 = vpack.c.bf16 %v499, %v499
  %v502 = vpack.c.bf16 %v455, %v455
  %v503 = vld [vmem:[%s2] sm:$0xf]
  %v504 = vld [vmem:[%s2 + $0x4] sm:$0xf]
  %v505 = vld [vmem:[%s2 + $0x8] sm:$0xf]
  %v506 = vld [vmem:[%s2 + $0xc] sm:$0xf]
  %v507 = vld [vmem:[%s2 + $0x10] sm:$0xf]
  %v508 = vld [vmem:[%s2 + $0x14] sm:$0xf]
  %v509 = vld [vmem:[%s2 + $0x18] sm:$0xf]
  %v510 = vld [vmem:[%s2 + $0x1c] sm:$0xf]
  %v511 = vld [vmem:[%s2 + $0x20] sm:$0xf]
  %v512 = vld [vmem:[%s2 + $0x24] sm:$0xf]
  %v513 = vld [vmem:[%s2 + $0x28] sm:$0xf]
  %v514 = vld [vmem:[%s2 + $0x2c] sm:$0xf]
  %v515 = vld [vmem:[%s2 + $0x30] sm:$0xf]
  %v516 = vld [vmem:[%s2 + $0x34] sm:$0xf]
  %v517 = vld [vmem:[%s2 + $0x38] sm:$0xf]
  %v518 = vld [vmem:[%s2 + $0x3c] sm:$0xf]
  %v519 = vld [vmem:[%s2 + $0x40] sm:$0xf]
  %v520 = vld [vmem:[%s2 + $0x44] sm:$0xf]
  %v521 = vld [vmem:[%s2 + $0x48] sm:$0xf]
  %v522 = vld [vmem:[%s2 + $0x4c] sm:$0xf]
  %v523 = vld [vmem:[%s2 + $0x50] sm:$0xf]
  %v524 = vld [vmem:[%s2 + $0x54] sm:$0xf]
  %v525 = vld [vmem:[%s2 + $0x58] sm:$0xf]
  %v526 = vld [vmem:[%s2 + $0x5c] sm:$0xf]
  %v527 = vld [vmem:[%s2 + $0x60] sm:$0xf]
  %v528 = vld [vmem:[%s2 + $0x64] sm:$0xf]
  %v529 = vld [vmem:[%s2 + $0x68] sm:$0xf]
  %v530 = vld [vmem:[%s2 + $0x6c] sm:$0xf]
  %v531 = vld [vmem:[%s2 + $0x70] sm:$0xf]
  %v532 = vld [vmem:[%s2 + $0x74] sm:$0xf]
  %v533 = vld [vmem:[%s2 + $0x78] sm:$0xf]
  %v534 = vld [vmem:[%s2 + $0x7c] sm:$0xf]
  %v535 = vld [vmem:[%s2 + $0x80] sm:$0xf]
  %v536 = vld [vmem:[%s2 + $0x84] sm:$0xf]
  %v537 = vld [vmem:[%s2 + $0x88] sm:$0xf]
  %v538 = vld [vmem:[%s2 + $0x8c] sm:$0xf]
  %v539 = vld [vmem:[%s3] sm:$0x1]
  %v541 = vlaneseq
  %v542 = vshrl.u32 %v541, 7
  %v543 = vsub.s32 0, %v542
  %v544 = vrot.slane %v539, %v543
  %v582 = vunpack.c.l.b16 %v503
  %v583 = vunpack.c.l.b16 %v504
  %v584 = vunpack.c.l.b16 %v505
  %v585 = vunpack.c.l.b16 %v506
  %v586 = vunpack.c.l.b16 %v507
  %v587 = vunpack.c.l.b16 %v508
  %v588 = vunpack.c.l.b16 %v509
  %v589 = vunpack.c.l.b16 %v510
  %v590 = vunpack.c.l.b16 %v511
  %v591 = vunpack.c.l.b16 %v512
  %v592 = vunpack.c.l.b16 %v513
  %v593 = vunpack.c.l.b16 %v514
  %v594 = vunpack.c.l.b16 %v515
  %v595 = vunpack.c.l.b16 %v516
  %v596 = vunpack.c.l.b16 %v517
  %v597 = vunpack.c.l.b16 %v518
  %v598 = vunpack.c.l.b16 %v519
  %v599 = vunpack.c.l.b16 %v520
  %v600 = vunpack.c.l.b16 %v521
  %v601 = vunpack.c.l.b16 %v522
  %v602 = vunpack.c.l.b16 %v523
  %v603 = vunpack.c.l.b16 %v524
  %v604 = vunpack.c.l.b16 %v525
  %v605 = vunpack.c.l.b16 %v526
  %v606 = vunpack.c.l.b16 %v527
  %v607 = vunpack.c.l.b16 %v528
  %v608 = vunpack.c.l.b16 %v529
  %v609 = vunpack.c.l.b16 %v530
  %v610 = vunpack.c.l.b16 %v531
  %v611 = vunpack.c.l.b16 %v532
  %v612 = vunpack.c.l.b16 %v533
  %v613 = vunpack.c.l.b16 %v534
  %v614 = vunpack.c.l.b16 %v535
  %v615 = vunpack.c.l.b16 %v536
  %v616 = vunpack.c.l.b16 %v537
  %v617 = vunpack.c.l.b16 %v538
  %v618 = vpack.c.b16 %v583, %v582
  %v619 = vpack.c.b16 %v585, %v584
  %v620 = vpack.c.b16 %v587, %v586
  %v621 = vpack.c.b16 %v589, %v588
  %v622 = vpack.c.b16 %v591, %v590
  %v623 = vpack.c.b16 %v593, %v592
  %v624 = vpack.c.b16 %v595, %v594
  %v625 = vpack.c.b16 %v597, %v596
  %v626 = vpack.c.b16 %v599, %v598
  %v627 = vpack.c.b16 %v601, %v600
  %v628 = vpack.c.b16 %v603, %v602
  %v629 = vpack.c.b16 %v605, %v604
  %v630 = vpack.c.b16 %v607, %v606
  %v631 = vpack.c.b16 %v609, %v608
  %v632 = vpack.c.b16 %v611, %v610
  %v633 = vpack.c.b16 %v613, %v612
  %v634 = vpack.c.b16 %v615, %v614
  %v635 = vpack.c.b16 %v617, %v616
  %v655 = vsel %vm491, %v502, 0
  %657 = vmatprep.subr.bf16.mxu0 0
  %658 = vmatpush1.bf16.msra.mxu0 %v618
  %659 = vmatprep.subr.bf16.mxu0 0
  %660 = vmatpush1.bf16.msra.mxu0 %v619
  %661 = vmatprep.subr.bf16.mxu0 0
  %662 = vmatpush1.bf16.msra.mxu0 %v620
  %663 = vmatprep.subr.bf16.mxu0 0
  %664 = vmatpush1.bf16.msra.mxu0 %v621
  %665 = vmatprep.subr.bf16.mxu0 0
  %666 = vmatpush1.bf16.msra.mxu0 %v622
  %667 = vmatprep.subr.bf16.mxu0 0
  %668 = vmatpush1.bf16.msra.mxu0 %v623
  %669 = vmatprep.subr.bf16.mxu0 0
  %670 = vmatpush1.bf16.msra.mxu0 %v624
  %671 = vmatprep.subr.bf16.mxu0 0
  %672 = vmatpush1.bf16.msra.mxu0 %v625
  %673 = vmatprep.subr.bf16.mxu0 0
  %674 = vmatpush1.bf16.msra.mxu0 %v626
  %675 = vmatprep.subr.bf16.mxu0 0
  %676 = vmatpush1.bf16.msra.mxu0 %v627
  %677 = vmatprep.subr.bf16.mxu0 0
  %678 = vmatpush1.bf16.msra.mxu0 %v628
  %679 = vmatprep.subr.bf16.mxu0 0
  %680 = vmatpush1.bf16.msra.mxu0 %v629
  %681 = vmatprep.subr.bf16.mxu0 0
  %682 = vmatpush1.bf16.msra.mxu0 %v630
  %683 = vmatprep.subr.bf16.mxu0 0
  %684 = vmatpush1.bf16.msra.mxu0 %v631
  %685 = vmatprep.subr.bf16.mxu0 0
  %686 = vmatpush1.bf16.msra.mxu0 %v632
  %687 = vmatprep.subr.bf16.mxu0 0
  %688 = vmatpush1.bf16.msra.mxu0 %v633
  %689 = vmatprep.mubr.bf16.mxu0 %v501
  %690 = vmatmul.mubr.bf16.gmra.mrb[0].mxu0 %v500
  %v691 = vpop.f32.mrb[0].mxu0
  %v692 = vadd.f32 %v544, %v691
  %v693 = vpop.f32.mrb[0].mxu0
  %v694 = vpop.f32.mrb[0].mxu0
  %v695 = vpop.f32.mrb[0].mxu0
  %696 = vdwg.mxu0
  %697 = vmatprep.subr.bf16.mxu0 0
  %698 = vmatpush1.bf16.msra.mxu0 %v634
  %699 = vmatprep.subr.bf16.mxu0 0
  %700 = vmatpush1.bf16.msra.mxu0 %v635
  %701 = vmatprep.subr.bf16.mxu0 0
  %702 = vmatpush1.bf16.msra.mxu0 0
  %703 = vmatprep.subr.bf16.mxu0 0
  %704 = vmatpush1.bf16.msra.mxu0 0
  %705 = vmatprep.subr.bf16.mxu0 0
  %706 = vmatpush1.bf16.msra.mxu0 0
  %707 = vmatprep.subr.bf16.mxu0 0
  %708 = vmatpush1.bf16.msra.mxu0 0
  %709 = vmatprep.subr.bf16.mxu0 0
  %710 = vmatpush1.bf16.msra.mxu0 0
  %711 = vmatprep.subr.bf16.mxu0 0
  %712 = vmatpush1.bf16.msra.mxu0 0
  %713 = vmatprep.subr.bf16.mxu0 0
  %714 = vmatpush1.bf16.msra.mxu0 0
  %715 = vmatprep.subr.bf16.mxu0 0
  %716 = vmatpush1.bf16.msra.mxu0 0
  %717 = vmatprep.subr.bf16.mxu0 0
  %718 = vmatpush1.bf16.msra.mxu0 0
  %719 = vmatprep.subr.bf16.mxu0 0
  %720 = vmatpush1.bf16.msra.mxu0 0
  %721 = vmatprep.subr.bf16.mxu0 0
  %722 = vmatpush1.bf16.msra.mxu0 0
  %723 = vmatprep.subr.bf16.mxu0 0
  %724 = vmatpush1.bf16.msra.mxu0 0
  %725 = vmatprep.subr.bf16.mxu0 0
  %726 = vmatpush1.bf16.msra.mxu0 0
  %727 = vmatprep.subr.bf16.mxu0 0
  %728 = vmatpush1.bf16.msra.mxu0 0
  %729 = vmatprep.mubr.bf16.mxu0 0
  %730 = vmatmul.mubr.bf16.gmra.mrb[0].mxu0 %v655
  %v731 = vpop.f32.mrb[0].mxu0
  %v732 = vadd.f32 %v692, %v731
  %v733 = vpop.f32.mrb[0].mxu0
  %v734 = vpop.f32.mrb[0].mxu0
  %v735 = vpop.f32.mrb[0].mxu0
  %736 = vdwg.mxu0
  %v737 = vmax.f32 %v732, 0.0
  %v738 = vld [vmem:[%s4] sm:$0xff]
  %v739 = vld [vmem:[%s4 + $0x8] sm:$0xf]
  %v740 = vld [vmem:[%s5] sm:$0x1]
  %v742 = vlaneseq
  %v743 = vshrl.u32 %v742, 7
  %v744 = vsub.s32 0, %v743
  %v745 = vrot.slane %v740, %v744
  %vm747 = vcmask 97280
  %v749 = vsel %vm747, %v737, 0
  %v752 = vsel %vm66, %v739, 0
  %754 = vmatprep.subr.mxu0 0.0
  %755 = vmatpush1.msra.mxu0 %v738
  %756 = vmatprep.subr.mxu0 0.0
  %757 = vmatpush1.msra.mxu0 %v752
  %758 = vmatprep.subr.mxu0 0.0
  %759 = vmatpush1.msra.mxu0 0.0
  %760 = vmatprep.subr.mxu0 0.0
  %761 = vmatpush1.msra.mxu0 0.0
  %762 = vmatprep.subr.mxu0 0.0
  %763 = vmatpush1.msra.mxu0 0.0
  %764 = vmatprep.subr.mxu0 0.0
  %765 = vmatpush1.msra.mxu0 0.0
  %766 = vmatprep.subr.mxu0 0.0
  %767 = vmatpush1.msra.mxu0 0.0
  %768 = vmatprep.subr.mxu0 0.0
  %769 = vmatpush1.msra.mxu0 0.0
  %770 = vmatprep.subr.mxu0 0.0
  %771 = vmatpush1.msra.mxu0 0.0
  %772 = vmatprep.subr.mxu0 0.0
  %773 = vmatpush1.msra.mxu0 0.0
  %774 = vmatprep.subr.mxu0 0.0
  %775 = vmatpush1.msra.mxu0 0.0
  %776 = vmatprep.subr.mxu0 0.0
  %777 = vmatpush1.msra.mxu0 0.0
  %778 = vmatprep.subr.mxu0 0.0
  %779 = vmatpush1.msra.mxu0 0.0
  %780 = vmatprep.subr.mxu0 0.0
  %781 = vmatpush1.msra.mxu0 0.0
  %782 = vmatprep.subr.mxu0 0.0
  %783 = vmatpush1.msra.mxu0 0.0
  %784 = vmatprep.subr.mxu0 0.0
  %785 = vmatpush1.msra.mxu0 0.0
  %786 = vmatprep.subr.mxu0 0.0
  %787 = vmatpush1.msra.mxu0 0.0
  %788 = vmatprep.subr.mxu0 0.0
  %789 = vmatpush1.msra.mxu0 0.0
  %790 = vmatprep.subr.mxu0 0.0
  %791 = vmatpush1.msra.mxu0 0.0
  %792 = vmatprep.subr.mxu0 0.0
  %793 = vmatpush1.msra.mxu0 0.0
  %794 = vmatprep.subr.mxu0 0.0
  %795 = vmatpush1.msra.mxu0 0.0
  %796 = vmatprep.subr.mxu0 0.0
  %797 = vmatpush1.msra.mxu0 0.0
  %798 = vmatprep.subr.mxu0 0.0
  %799 = vmatpush1.msra.mxu0 0.0
  %800 = vmatprep.subr.mxu0 0.0
  %801 = vmatpush1.msra.mxu0 0.0
  %802 = vmatprep.subr.mxu0 0.0
  %803 = vmatpush1.msra.mxu0 0.0
  %804 = vmatprep.subr.mxu0 0.0
  %805 = vmatpush1.msra.mxu0 0.0
  %806 = vmatprep.subr.mxu0 0.0
  %807 = vmatpush1.msra.mxu0 0.0
  %808 = vmatprep.subr.mxu0 0.0
  %809 = vmatpush1.msra.mxu0 0.0
  %810 = vmatprep.subr.mxu0 0.0
  %811 = vmatpush1.msra.mxu0 0.0
  %812 = vmatprep.subr.mxu0 0.0
  %813 = vmatpush1.msra.mxu0 0.0
  %814 = vmatprep.subr.mxu0 0.0
  %815 = vmatpush1.msra.mxu0 0.0
  %816 = vmatprep.subr.mxu0 0.0
  %817 = vmatpush1.msra.mxu0 0.0
  %818 = vmatprep.mubr.f32.mxu0 0.0
  %819 = vmatmul.mubr.f32.gmra.mrb[0].mxu0 %v749
  %v820 = vpop.f32.mrb[0].mxu0
  %v821 = vadd.f32 %v745, %v820
  %v822 = vpop.f32.mrb[0].mxu0
  %823 = vdwg.mxu0
  %vm824 = vcmask 15360
  %825 = vst.msk [vmem:[%s6] sm:$0xff] %vm824, %v821
  // Predicated region
  $region26: #{textcnn_forward.1} parent=0 // pred_check
    _
  $region27: #{textcnn_forward.1} parent=0 // pred_check_branch
    %827 = sbr.rel (0) target = $region29
  $region28: #{textcnn_forward.1} parent=0 // pred_region
    _
  $region29: #{textcnn_forward.1} parent=0 // pred_fallthru
    _
  // Predicated region
  $region30: #{textcnn_forward.1} parent=0 // pred_check
    _
  $region31: #{textcnn_forward.1} parent=0 // pred_check_branch
    %829 = sbr.rel (0) target = $region33
  $region32: #{textcnn_forward.1} parent=0 // pred_region
    _
  $region33: #{textcnn_forward.1} parent=0 // pred_fallthru
    _

</llo_original>
